<compile_context>
chip_gen: v5e
topology: v5e:2x2
jax: 0.10.0
libtpu: 0.0.40
codegen_flags: <defaults>
</compile_context>

<pallas_src>
import functools

import jax
import jax.numpy as jnp
from jax.experimental import pallas as pl
from jax.experimental.pallas import tpu as pltpu

IN_F = 2      # fc1 input features
HID_F = 2     # fc1 output / fc2 input features
OUT_F = 1     # fc2 output features
LANE = 128    # TPU lane width
SUBLANE = 8   # f32 sublanes per vreg


def _round_up(n, m):
    return ((n + m - 1) // m) * m


def mlp_kernel(w1_ref, b1_ref, w2_ref, b2_ref, x_ref, o_ref):
    # x_ref: (2, R, 128) VMEM block -- feature-major, batch spans (sublane, lane) densely.
    x0 = x_ref[0]                      # (R, 128) dense slab, feature 0
    x1 = x_ref[1]                      # (R, 128) dense slab, feature 1

    # The 9 scalar parameters live in SMEM (scalar broadcasts into VPU ops).
    w1_00 = w1_ref[0, 0]
    w1_01 = w1_ref[0, 1]
    w1_10 = w1_ref[1, 0]
    w1_11 = w1_ref[1, 1]
    b1_0 = b1_ref[0]
    b1_1 = b1_ref[1]
    w2_00 = w2_ref[0, 0]
    w2_01 = w2_ref[0, 1]
    b2_0 = b2_ref[0]

    # fc1 + ReLU + fc2, pure VPU elementwise on full (8,128) vregs (exact f32).
    h0 = jnp.maximum(x0 * w1_00 + x1 * w1_01 + b1_0, 0.0)
    h1 = jnp.maximum(x0 * w1_10 + x1 * w1_11 + b1_1, 0.0)
    o_ref[...] = h0 * w2_00 + h1 * w2_01 + b2_0


def _rows_per_tile(total_rows, rows_cap):
    """Rows (of 128 lanes) per grid step: dense, VMEM-bounded, grid>=2 when worthwhile."""
    rows_cap = max(SUBLANE, (rows_cap // SUBLANE) * SUBLANE)
    if total_rows <= rows_cap:
        if total_rows >= 2 * SUBLANE:
            # Split so grid >= 2: lets v7x shard tiles across both TensorCores.
            return min(_round_up((total_rows + 1) // 2, SUBLANE), total_rows)
        return total_rows  # single tile; block rows == full array rows is always legal
    return rows_cap


@functools.partial(jax.jit, static_argnames=("block_lanes",))
def simple_model_forward(x, w1, b1, w2, b2, block_lanes=512 * 1024):
    """x: (B, 2) f32.  w1: (2, 2), b1: (2,), w2: (1, 2), b2: (1,)  (PyTorch layout)."""
    B = x.shape[0]
    Bp = _round_up(B, LANE)            # pad only to a lane multiple, never to a tile multiple
    total_rows = Bp // LANE
    rows = _rows_per_tile(total_rows, block_lanes // LANE)
    grid = (pl.cdiv(total_rows, rows),)

    xf = x.astype(jnp.float32)
    if Bp != B:
        xf = jnp.pad(xf, ((0, Bp - B), (0, 0)))          # at most 127 padded elements
    # One transpose copy to feature-major, then a free contiguous reshape to (2, R, 128).
    x3 = jnp.transpose(xf).reshape(IN_F, total_rows, LANE)

    out = pl.pallas_call(
        mlp_kernel,
        out_shape=jax.ShapeDtypeStruct((total_rows, LANE), jnp.float32),
        grid=grid,
        in_specs=[
            pl.BlockSpec(memory_space=pltpu.MemorySpace.SMEM),    # w1 (2,2)
            pl.BlockSpec(memory_space=pltpu.MemorySpace.SMEM),    # b1 (2,)
            pl.BlockSpec(memory_space=pltpu.MemorySpace.SMEM),    # w2 (1,2)
            pl.BlockSpec(memory_space=pltpu.MemorySpace.SMEM),    # b2 (1,)
            pl.BlockSpec((IN_F, rows, LANE), lambda i: (0, i, 0)),  # x, dense batch tile
        ],
        out_specs=pl.BlockSpec((rows, LANE), lambda i: (i, 0)),     # lane-dense output slab
        compiler_params=pltpu.CompilerParams(
            dimension_semantics=("parallel",),                      # megacore sharding on v7x
            vmem_limit_bytes=32 * 1024 * 1024,                      # explicit budget, all gens
        ),
    )(
        w1.astype(jnp.float32),
        b1.astype(jnp.float32),
        w2.astype(jnp.float32),
        b2.astype(jnp.float32),
        x3,
    )

    # Row-major order of `out` equals the flattened (B, 1) result: reshape is free,
    # slice only when padding was needed.
    y = out.reshape(Bp)
    if Bp != B:
        y = y[:B]
    return y.reshape(B, OUT_F)


if __name__ == "__main__":
    key = jax.random.PRNGKey(0)
    k_x, k_w1, k_b1, k_w2, k_b2 = jax.random.split(key, 5)

    B = 8
    x = jax.random.normal(k_x, (B, IN_F), jnp.float32)

    # Deterministic parameter init (uniform like PyTorch's default, bound = 1/sqrt(fan_in)).
    bound1 = 1.0 / (IN_F ** 0.5)
    w1 = jax.random.uniform(k_w1, (HID_F, IN_F), jnp.float32, -bound1, bound1)
    b1 = jax.random.uniform(k_b1, (HID_F,), jnp.float32, -bound1, bound1)
    bound2 = 1.0 / (HID_F ** 0.5)
    w2 = jax.random.uniform(k_w2, (OUT_F, HID_F), jnp.float32, -bound2, bound2)
    b2 = jax.random.uniform(k_b2, (OUT_F,), jnp.float32, -bound2, bound2)

    out = simple_model_forward(x, w1, b1, w2, b2)
    out = jax.block_until_ready(out)

    # Pure-JAX reference to sanity-check semantics.
    ref = jnp.maximum(x @ w1.T + b1, 0.0) @ w2.T + b2
    assert out.shape == (B, OUT_F), out.shape
    assert jnp.allclose(out, ref, atol=1e-5), (out, ref)

    print("KERNEL_OK")
</pallas_src>

<mosaic_0001>
module attributes {stable_mosaic.version = 11 : i64} {
  func.func @mlp_kernel(%arg0: i32, %arg1: memref<2x2xf32, #tpu.memory_space<smem>>, %arg2: memref<2xf32, #tpu.memory_space<smem>>, %arg3: memref<1x2xf32, #tpu.memory_space<smem>>, %arg4: memref<1xf32, #tpu.memory_space<smem>>, %arg5: memref<2x1x128xf32, #tpu.memory_space<vmem>>, %arg6: memref<1x128xf32, #tpu.memory_space<vmem>>) attributes {dimension_semantics = [#tpu.dimension_semantics<parallel>], iteration_bounds = array<i64: 1>, scalar_prefetch = 0 : i64, scratch_operands = 0 : i64, tpu.core_type = #tpu.core_type<tc>, window_params = [{transform_indices = @transform_0, window_bounds = array<i64: 2, 2>}, {transform_indices = @transform_1, window_bounds = array<i64: 2>}, {transform_indices = @transform_2, window_bounds = array<i64: 1, 2>}, {transform_indices = @transform_3, window_bounds = array<i64: 1>}, {transform_indices = @transform_4, window_bounds = array<i64: 2, 1, 128>}, {transform_indices = @transform_5, window_bounds = array<i64: 1, 128>}]} {
    %c0 = arith.constant 0 : index
    %c0_0 = arith.constant 0 : index
    %c0_1 = arith.constant 0 : index
    %0 = vector.load %arg5[%c0, %c0_0, %c0_1] : memref<2x1x128xf32, #tpu.memory_space<vmem>>, vector<1x1x128xf32>
    %1 = vector.shape_cast %0 : vector<1x1x128xf32> to vector<1x128xf32>
    %c1 = arith.constant 1 : index
    %c0_2 = arith.constant 0 : index
    %c0_3 = arith.constant 0 : index
    %2 = vector.load %arg5[%c1, %c0_2, %c0_3] : memref<2x1x128xf32, #tpu.memory_space<vmem>>, vector<1x1x128xf32>
    %3 = vector.shape_cast %2 : vector<1x1x128xf32> to vector<1x128xf32>
    %c0_4 = arith.constant 0 : index
    %c0_5 = arith.constant 0 : index
    %4 = memref.load %arg1[%c0_4, %c0_5] : memref<2x2xf32, #tpu.memory_space<smem>>
    %c0_6 = arith.constant 0 : index
    %c1_7 = arith.constant 1 : index
    %5 = memref.load %arg1[%c0_6, %c1_7] : memref<2x2xf32, #tpu.memory_space<smem>>
    %c1_8 = arith.constant 1 : index
    %c0_9 = arith.constant 0 : index
    %6 = memref.load %arg1[%c1_8, %c0_9] : memref<2x2xf32, #tpu.memory_space<smem>>
    %c1_10 = arith.constant 1 : index
    %c1_11 = arith.constant 1 : index
    %7 = memref.load %arg1[%c1_10, %c1_11] : memref<2x2xf32, #tpu.memory_space<smem>>
    %c0_12 = arith.constant 0 : index
    %8 = memref.load %arg2[%c0_12] : memref<2xf32, #tpu.memory_space<smem>>
    %c1_13 = arith.constant 1 : index
    %9 = memref.load %arg2[%c1_13] : memref<2xf32, #tpu.memory_space<smem>>
    %c0_14 = arith.constant 0 : index
    %c0_15 = arith.constant 0 : index
    %10 = memref.load %arg3[%c0_14, %c0_15] : memref<1x2xf32, #tpu.memory_space<smem>>
    %c0_16 = arith.constant 0 : index
    %c1_17 = arith.constant 1 : index
    %11 = memref.load %arg3[%c0_16, %c1_17] : memref<1x2xf32, #tpu.memory_space<smem>>
    %c0_18 = arith.constant 0 : index
    %12 = memref.load %arg4[%c0_18] : memref<1xf32, #tpu.memory_space<smem>>
    %13 = vector.broadcast %4 : f32 to vector<1x128xf32>
    %14 = arith.mulf %1, %13 : vector<1x128xf32>
    %15 = vector.broadcast %5 : f32 to vector<1x128xf32>
    %16 = arith.mulf %3, %15 : vector<1x128xf32>
    %17 = arith.addf %14, %16 : vector<1x128xf32>
    %18 = vector.broadcast %8 : f32 to vector<1x128xf32>
    %19 = arith.addf %17, %18 : vector<1x128xf32>
    %cst = arith.constant 0.000000e+00 : f32
    %20 = vector.broadcast %cst : f32 to vector<1x128xf32>
    %21 = arith.maximumf %19, %20 : vector<1x128xf32>
    %22 = vector.broadcast %6 : f32 to vector<1x128xf32>
    %23 = arith.mulf %1, %22 : vector<1x128xf32>
    %24 = vector.broadcast %7 : f32 to vector<1x128xf32>
    %25 = arith.mulf %3, %24 : vector<1x128xf32>
    %26 = arith.addf %23, %25 : vector<1x128xf32>
    %27 = vector.broadcast %9 : f32 to vector<1x128xf32>
    %28 = arith.addf %26, %27 : vector<1x128xf32>
    %cst_19 = arith.constant 0.000000e+00 : f32
    %29 = vector.broadcast %cst_19 : f32 to vector<1x128xf32>
    %30 = arith.maximumf %28, %29 : vector<1x128xf32>
    %31 = vector.broadcast %10 : f32 to vector<1x128xf32>
    %32 = arith.mulf %21, %31 : vector<1x128xf32>
    %33 = vector.broadcast %11 : f32 to vector<1x128xf32>
    %34 = arith.mulf %30, %33 : vector<1x128xf32>
    %35 = arith.addf %32, %34 : vector<1x128xf32>
    %36 = vector.broadcast %12 : f32 to vector<1x128xf32>
    %37 = arith.addf %35, %36 : vector<1x128xf32>
    %c0_20 = arith.constant 0 : index
    %c0_21 = arith.constant 0 : index
    %38 = vector.load %arg6[%c0_20, %c0_21] : memref<1x128xf32, #tpu.memory_space<vmem>>, vector<1x128xf32>
    tpu.vector_store %arg6[%c0_20, %c0_21], %37 {strides = array<i32>} : memref<1x128xf32, #tpu.memory_space<vmem>>, vector<1x128xf32>,
    return
  }
  func.func @transform_0(%arg0: i32) -> (i32, i32) {
    %c0_i32 = arith.constant 0 : i32
    %c0_i32_0 = arith.constant 0 : i32
    %c0_i32_1 = arith.constant 0 : i32
    return %c0_i32, %c0_i32_0 : i32, i32
  }
  func.func @transform_1(%arg0: i32) -> i32 {
    %c0_i32 = arith.constant 0 : i32
    %c0_i32_0 = arith.constant 0 : i32
    return %c0_i32 : i32
  }
  func.func @transform_2(%arg0: i32) -> (i32, i32) {
    %c0_i32 = arith.constant 0 : i32
    %c0_i32_0 = arith.constant 0 : i32
    %c0_i32_1 = arith.constant 0 : i32
    return %c0_i32, %c0_i32_0 : i32, i32
  }
  func.func @transform_3(%arg0: i32) -> i32 {
    %c0_i32 = arith.constant 0 : i32
    %c0_i32_0 = arith.constant 0 : i32
    return %c0_i32 : i32
  }
  func.func @transform_4(%arg0: i32) -> (i32, i32, i32) {
    %c0_i32 = arith.constant 0 : i32
    %c0_i32_0 = arith.constant 0 : i32
    %c0_i32_1 = arith.constant 0 : i32
    return %c0_i32, %arg0, %c0_i32_0 : i32, i32, i32
  }
  func.func @transform_5(%arg0: i32) -> (i32, i32) {
    %c0_i32 = arith.constant 0 : i32
    %c0_i32_0 = arith.constant 0 : i32
    return %arg0, %c0_i32 : i32, i32
  }
}

</mosaic_0001>

<llo_original>
// kernel: simple_model_forward.1
$region0: #{simple_model_forward.1}
  #allocation0 [shape = 'u32[]', space=smem, size = 0x4, offset = 0x4, fixed_abs, tag = 'smem constant byte address 0x4 - core index']
  #allocation1 [shape = 'u32[72,128]{1,0:T(1,128)}', space=vmem, size = 0x9000, scoped, tag = 'internal scratch']
  #allocation2 [shape = 'f32[1]{0:T(128)S(6)}', space=smem, size = 0x200, scoped, tag = 'scoped memory for simple_model_forward.1']
  %s0 = inlined_call_operand.vmem [shape: f32[2,2], index: 0, kind: input, shape index: {}]
  %s1 = inlined_call_operand.vmem [shape: f32[2], index: 1, kind: input, shape index: {}]
  %s2 = inlined_call_operand.vmem [shape: f32[1,2], index: 2, kind: input, shape index: {}]
  %s3 = inlined_call_operand.<no memory space> [shape: f32[1], index: 3, kind: input, shape index: {}]
  %s4 = inlined_call_operand.vmem [shape: f32[2,1,128], index: 4, kind: input, shape index: {}]
  %s5 = inlined_call_operand.vmem [shape: f32[1,128], index: 5, kind: output, shape index: {}]
  %s6 = sld [smem:[#allocation0]]
  $region42: #{simple_model_forward.1} parent=0
    _
  %s8 = ssub.s32 1, %s6
  %s9 = scalar_select 0, %s8, %s6
  %10 = sst [smem:[#allocation2]] %s3
  $region1: #{simple_model_forward.1} parent=0
    #allocation3 [shape = 'u8[1024]{0}', space=smem, size = 0x400, scoped, tag = 'input window, operand 0, single buffered']
    #allocation4 [shape = 's32[1]{0}', space=sflag, size = 0x4, scoped, tag = 'scoped memory for simple_model_forward.1']
    #allocation5 [shape = 'u8[512]{0}', space=smem, size = 0x200, scoped, tag = 'input window, operand 1, single buffered']
    #allocation6 [shape = 's32[1]{0}', space=sflag, size = 0x4, scoped, tag = 'scoped memory for simple_model_forward.1']
    #allocation7 [shape = 'u8[512]{0}', space=smem, size = 0x200, scoped, tag = 'input window, operand 2, single buffered']
    %11 = vsyncpa [#allocation4], 0
    %12 = vsyncpa [#allocation6], 0
    // Predicated region
    $region2: #{simple_model_forward.1} parent=1 // pred_check
      _
    $region3: #{simple_model_forward.1} parent=1 // pred_check_branch
      %14 = sbr.rel (0) target = $region5
    $region4: #{simple_model_forward.1} parent=1 // pred_region
      %16 = vsyncadd [#allocation4], 0
      %s18 = sshll.u32 %s0, 4
      %s19 = int_to_ptr.vmem [resolvable:$true] %s18
      %21 = dma.vmem_to_smem %s19, 32, [#allocation3], [#allocation4]
    $region5: #{simple_model_forward.1} parent=1 // pred_fallthru
      _
    // Predicated region
    $region6: #{simple_model_forward.1} parent=1 // pred_check
      _
    $region7: #{simple_model_forward.1} parent=1 // pred_check_branch
      %23 = sbr.rel (0) target = $region9
    $region8: #{simple_model_forward.1} parent=1 // pred_region
      %25 = vsyncadd [#allocation6], 0
      %s27 = sshll.u32 %s1, 4
      %s28 = int_to_ptr.vmem [resolvable:$true] %s27
      %30 = dma.vmem_to_smem %s28, 16, [#allocation5], [#allocation6]
    $region9: #{simple_model_forward.1} parent=1 // pred_fallthru
      _
    // Predicated region
    $region10: #{simple_model_forward.1} parent=1 // pred_check
      _
    $region11: #{simple_model_forward.1} parent=1 // pred_check_branch
      %32 = sbr.rel (0) target = $region13
    $region12: #{simple_model_forward.1} parent=1 // pred_region
      %34 = vsyncadd [#allocation6], 0
      %s36 = sshll.u32 %s2, 4
      %s37 = int_to_ptr.vmem [resolvable:$true] %s36
      %39 = dma.vmem_to_smem %s37, 16, [#allocation7], [#allocation6]
    $region13: #{simple_model_forward.1} parent=1 // pred_fallthru
      _
    // Predicated region
    $region14: #{simple_model_forward.1} parent=1 // pred_check
      _
    $region15: #{simple_model_forward.1} parent=1 // pred_check_branch
      %41 = sbr.rel (0) target = $region17
    $region16: #{simple_model_forward.1} parent=1 // pred_region
      _
    $region17: #{simple_model_forward.1} parent=1 // pred_fallthru
      _
    // Predicated region
    $region18: #{simple_model_forward.1} parent=1 // pred_check
      _
    $region19: #{simple_model_forward.1} parent=1 // pred_check_branch
      %43 = sbr.rel (0) target = $region21
    $region20: #{simple_model_forward.1} parent=1 // pred_region
      _
    $region21: #{simple_model_forward.1} parent=1 // pred_fallthru
      _
    // Predicated region
    $region22: #{simple_model_forward.1} parent=1 // pred_check
      _
    $region23: #{simple_model_forward.1} parent=1 // pred_check_branch
      %45 = sbr.rel (0) target = $region25
    $region24: #{simple_model_forward.1} parent=1 // pred_region
      %47 = dma.done [#allocation4], 32
    $region25: #{simple_model_forward.1} parent=1 // pred_fallthru
      _
    // Predicated region
    $region26: #{simple_model_forward.1} parent=1 // pred_check
      _
    $region27: #{simple_model_forward.1} parent=1 // pred_check_branch
      %49 = sbr.rel (0) target = $region29
    $region28: #{simple_model_forward.1} parent=1 // pred_region
      %51 = dma.done [#allocation6], 16
    $region29: #{simple_model_forward.1} parent=1 // pred_fallthru
      _
    // Predicated region
    $region30: #{simple_model_forward.1} parent=1 // pred_check
      _
    $region31: #{simple_model_forward.1} parent=1 // pred_check_branch
      %53 = sbr.rel (0) target = $region33
    $region32: #{simple_model_forward.1} parent=1 // pred_region
      %55 = dma.done [#allocation6], 16
    $region33: #{simple_model_forward.1} parent=1 // pred_fallthru
      _
    %56 = sfence
    %v57 = vld [vmem:[%s4] sm:$0x1]
    %s58 = scalar_lea.vmem %s4, 1
    %v59 = vld [vmem:[%s58] sm:$0x1]
    %s60 = sld [smem:[#allocation3]]
    %s61 = sld [smem:[#allocation3 + $0x1]]
    %s62 = sld [smem:[#allocation3 + $0x80]]
    %s63 = sld [smem:[#allocation3 + $0x81]]
    %s64 = sld [smem:[#allocation5]]
    %s65 = sld [smem:[#allocation5 + $0x1]]
    %s66 = sld [smem:[#allocation7]]
    %s67 = sld [smem:[#allocation7 + $0x1]]
    %s68 = sld [smem:[#allocation2]]
    %v69 = vstv %s60
    %v70 = vmul.f32 %v57, %v69
    %v71 = vstv %s61
    %v72 = vmul.f32 %v59, %v71
    %v73 = vadd.f32 %v70, %v72
    %v74 = vstv %s64
    %v75 = vadd.f32 %v73, %v74
    %v76 = vmax.f32 %v75, 0.0
    %v77 = vstv %s62
    %v78 = vmul.f32 %v57, %v77
    %v79 = vstv %s63
    %v80 = vmul.f32 %v59, %v79
    %v81 = vadd.f32 %v78, %v80
    %v82 = vstv %s65
    %v83 = vadd.f32 %v81, %v82
    %v84 = vmax.f32 %v83, 0.0
    %v85 = vstv %s66
    %v86 = vmul.f32 %v76, %v85
    %v87 = vstv %s67
    %v88 = vmul.f32 %v84, %v87
    %v89 = vadd.f32 %v86, %v88
    %v90 = vstv %s68
    %v91 = vadd.f32 %v89, %v90
    %92 = vst [vmem:[%s5] sm:$0x1] %v91
    // Predicated region
    $region34: #{simple_model_forward.1} parent=1 // pred_check
      _
    $region35: #{simple_model_forward.1} parent=1 // pred_check_branch
      %94 = sbr.rel (0) target = $region37
    $region36: #{simple_model_forward.1} parent=1 // pred_region
      _
    $region37: #{simple_model_forward.1} parent=1 // pred_fallthru
      _
    // Predicated region
    $region38: #{simple_model_forward.1} parent=1 // pred_check
      _
    $region39: #{simple_model_forward.1} parent=1 // pred_check_branch
      %96 = sbr.rel (0) target = $region41
    $region40: #{simple_model_forward.1} parent=1 // pred_region
      _
    $region41: #{simple_model_forward.1} parent=1 // pred_fallthru
      _
    %97 = vsyncpa [#allocation4], 1
    %98 = vsyncpa [#allocation6], 1

</llo_original>
